<compile_context>
chip_gen: v6e
topology: v6e:2x2x1
jax: 0.10.0
libtpu: 0.0.40
codegen_flags: <defaults>
</compile_context>

<pallas_src>
import functools

import jax
import jax.numpy as jnp
from jax.experimental import pallas as pl
from jax.experimental.pallas import tpu as pltpu

FC_DIM = 64        # fc_dim in the reference code (in_features)
OUT_DIM = 100      # number of classes (out_features)
OUT_PAD = 128      # lane-dense padded output width (next multiple of 128)
TM_MAX = 8192      # max batch-tile rows (amortizes per-grid-step overhead)
SPLIT_MIN = 1024   # above this many rows, force >= 2 grid steps (v7x dual-TC)


def _round_up(n, m):
    return ((n + m - 1) // m) * m


def _choose_tm(batch):
    """Pick the batch-tile size (rows). Multiple of 16 for bf16 sublanes."""
    b16 = _round_up(batch, 16)
    tm = min(TM_MAX, b16)
    # v7x has 2 TensorCores sharing the parallel grid axis: a single grid
    # step leaves one TC idle.  For large batches, split into >= 2 tiles.
    if b16 >= SPLIT_MIN and tm >= b16:
        tm = _round_up((b16 + 1) // 2, 16)
    return tm


def _ortho_linear_kernel(x_ref, wt_ref, o_ref):
    # One MXU pass per batch tile: (TM, 64) @ (64, 128) -> (TM, 128).
    # x arrives in its original dtype (f32); cast to the weight dtype (bf16)
    # in-kernel so the wrapper never materializes a second copy of x in HBM.
    x = x_ref[...].astype(wt_ref.dtype)
    acc = jnp.dot(x, wt_ref[...], preferred_element_type=jnp.float32)
    o_ref[...] = acc.astype(o_ref.dtype)


def prepare_weight(w, compute_dtype=jnp.bfloat16):
    """One-time weight preparation (hoisted out of the forward / attack loop).

    Args:
      w: (OUT_DIM, FC_DIM) float32 weight with orthonormal columns
         (nn.Linear layout: (out_features, in_features)).
      compute_dtype: dtype fed to the MXU (bf16 halves weight HBM traffic).

    Returns:
      (FC_DIM, OUT_PAD) W^T, zero-padded on the extra output lanes.
    """
    wt = jnp.zeros((FC_DIM, OUT_PAD), dtype=compute_dtype)
    wt = wt.at[:, :OUT_DIM].set(w.T.astype(compute_dtype))
    return wt


@functools.partial(jax.jit, static_argnames=("out_dtype", "return_padded"))
def mlp_out_ort_forward(x, wt_padded, *, out_dtype=jnp.float32,
                        return_padded=False):
    """Forward pass of MLP_OUT_ORT.

    Args:
      x: (B, FC_DIM) activations (f32; cast to the weight dtype in-kernel).
      wt_padded: (FC_DIM, OUT_PAD) prepared weight from `prepare_weight`.
      out_dtype: output store dtype (bf16 cuts the dominant write stream ~2x
        if the downstream attack loss tolerates it).
      return_padded: if True, return the lane-dense (B, OUT_PAD) logits
        (columns OUT_DIM..OUT_PAD-1 are zero and MUST be masked by the
        consumer); avoids an extra HBM round trip for the output slice.

    Returns:
      (B, OUT_DIM) logits (or (B, OUT_PAD) if return_padded).
    """
    B = x.shape[0]

    tm = _choose_tm(B)
    b_pad = _round_up(B, tm)

    if b_pad != B:
        # Zero rows are computed and then sliced off below (correct because
        # the matmul of zero rows is zero and never observed).
        x = jnp.pad(x, ((0, b_pad - B), (0, 0)))

    grid = (b_pad // tm,)

    in_item = jnp.dtype(x.dtype).itemsize
    w_item = jnp.dtype(wt_padded.dtype).itemsize
    out_item = jnp.dtype(out_dtype).itemsize
    cost = pl.CostEstimate(
        flops=2 * b_pad * FC_DIM * OUT_PAD,
        transcendentals=0,
        bytes_accessed=(b_pad * FC_DIM * in_item
                        + FC_DIM * OUT_PAD * w_item
                        + b_pad * OUT_PAD * out_item),
    )

    out_padded = pl.pallas_call(
        _ortho_linear_kernel,
        out_shape=jax.ShapeDtypeStruct((b_pad, OUT_PAD), out_dtype),
        grid=grid,
        in_specs=[
            # Batch-tiled activations (original dtype; cast happens in-kernel).
            pl.BlockSpec((tm, FC_DIM), lambda i: (i, 0)),
            # Constant weight block: stays VMEM-resident across the grid.
            pl.BlockSpec((FC_DIM, OUT_PAD), lambda i: (0, 0)),
        ],
        out_specs=pl.BlockSpec((tm, OUT_PAD), lambda i: (i, 0)),
        compiler_params=pltpu.CompilerParams(
            dimension_semantics=("parallel",),  # shard batch across TCs (v7x)
        ),
        cost_estimate=cost,
    )(x, wt_padded)

    if return_padded:
        # Consumer must mask / ignore classes OUT_DIM..OUT_PAD-1 (zeros).
        return out_padded[:B]
    # Strip batch padding and the 28 zero output lanes.
    return out_padded[:B, :OUT_DIM]


def make_orthogonal_weight(key):
    """Deterministic stand-in for the geotorch orthogonal parametrization.

    Returns a (OUT_DIM, FC_DIM) matrix with orthonormal columns (W^T W = I).
    """
    # TODO(synk): geotorch's exact parametrization (matrix-exp retraction of a
    # trainable tangent vector) has no Pallas equivalent; QR gives an
    # equivalent orthonormal-column weight for the forward pass.
    g = jax.random.normal(key, (OUT_DIM, FC_DIM), dtype=jnp.float32)
    q, _ = jnp.linalg.qr(g)  # q: (100, 64), q^T q = I_64
    return q


if __name__ == "__main__":
    key = jax.random.PRNGKey(0)
    k_x, k_w = jax.random.split(key)

    w = make_orthogonal_weight(k_w)            # (100, 64), orthonormal columns
    wt_padded = prepare_weight(w)              # one-time prep (hoisted)

    def check(batch, key_x):
        x = jax.random.normal(key_x, (batch, FC_DIM), dtype=jnp.float32)
        out = mlp_out_ort_forward(x, wt_padded)
        out = jax.block_until_ready(out)
        assert out.shape == (batch, OUT_DIM)

        # Reference with the same bf16 rounding (f32 accumulation).
        x_r = x.astype(jnp.bfloat16).astype(jnp.float32)
        w_r = w.T.astype(jnp.bfloat16).astype(jnp.float32)
        ref_bf16 = x_r @ w_r
        assert jnp.allclose(out, ref_bf16, atol=1e-3, rtol=1e-3)

        # Loose check against the pure-f32 module semantics.
        ref_f32 = x @ w.T
        assert jnp.allclose(out, ref_f32, atol=5e-2, rtol=5e-2)

    # Small batch (single tile) and a batch that exercises the pad path.
    check(8, jax.random.fold_in(k_x, 0))
    check(200, jax.random.fold_in(k_x, 1))

    # Padded-logits path: extra lanes must be zero.
    x_small = jax.random.normal(k_x, (8, FC_DIM), dtype=jnp.float32)
    out_pad = jax.block_until_ready(
        mlp_out_ort_forward(x_small, wt_padded, return_padded=True))
    assert out_pad.shape == (8, OUT_PAD)
    assert jnp.all(out_pad[:, OUT_DIM:] == 0.0)

    print("KERNEL_OK")
</pallas_src>

<mosaic_0001>
module attributes {stable_mosaic.version = 11 : i64} {
  func.func @_ortho_linear_kernel(%arg0: i32, %arg1: memref<16x64xf32, #tpu.memory_space<vmem>>, %arg2: memref<64x128xbf16, #tpu.memory_space<vmem>>, %arg3: memref<16x128xf32, #tpu.memory_space<vmem>>) attributes {dimension_semantics = [#tpu.dimension_semantics<parallel>], iteration_bounds = array<i64: 1>, scalar_prefetch = 0 : i64, scratch_operands = 0 : i64, tpu.core_type = #tpu.core_type<tc>, window_params = [{transform_indices = @transform_0, window_bounds = array<i64: 16, 64>}, {pipeline_mode = #tpu.pipeline_mode<synchronous>, transform_indices = @transform_1, window_bounds = array<i64: 64, 128>}, {transform_indices = @transform_2, window_bounds = array<i64: 16, 128>}]} {
    %c0 = arith.constant 0 : index
    %c0_0 = arith.constant 0 : index
    %0 = vector.load %arg1[%c0, %c0_0] : memref<16x64xf32, #tpu.memory_space<vmem>>, vector<16x64xf32>
    %1 = arith.truncf %0 : vector<16x64xf32> to vector<16x64xbf16>
    %c0_1 = arith.constant 0 : index
    %c0_2 = arith.constant 0 : index
    %2 = vector.load %arg2[%c0_1, %c0_2] : memref<64x128xbf16, #tpu.memory_space<vmem>>, vector<64x128xbf16>
    %cst = arith.constant dense<0.000000e+00> : vector<16x128xf32>
    %3 = tpu.matmul %1, %2, %cst {dimension_numbers = #tpu.dot_dimension_numbers<[1], [0], [0], [1], [0, 0, 1, 1], [], []>} : vector<16x64xbf16>, vector<64x128xbf16>, vector<16x128xf32> -> vector<16x128xf32>
    %c0_3 = arith.constant 0 : index
    %c0_4 = arith.constant 0 : index
    %4 = vector.load %arg3[%c0_3, %c0_4] : memref<16x128xf32, #tpu.memory_space<vmem>>, vector<16x128xf32>
    tpu.vector_store %arg3[%c0_3, %c0_4], %3 {strides = array<i32>} : memref<16x128xf32, #tpu.memory_space<vmem>>, vector<16x128xf32>,
    return
  }
  func.func @transform_0(%arg0: i32) -> (i32, i32) {
    %c0_i32 = arith.constant 0 : i32
    %c0_i32_0 = arith.constant 0 : i32
    return %arg0, %c0_i32 : i32, i32
  }
  func.func @transform_1(%arg0: i32) -> (i32, i32) {
    %c0_i32 = arith.constant 0 : i32
    %c0_i32_0 = arith.constant 0 : i32
    %c0_i32_1 = arith.constant 0 : i32
    return %c0_i32, %c0_i32_0 : i32, i32
  }
  func.func @transform_2(%arg0: i32) -> (i32, i32) {
    %c0_i32 = arith.constant 0 : i32
    %c0_i32_0 = arith.constant 0 : i32
    return %arg0, %c0_i32 : i32, i32
  }
}

</mosaic_0001>

<llo_original>
// kernel: mlp_out_ort_forward.1
$region0: #{mlp_out_ort_forward.1}
  #allocation0 [shape = 'u32[]', space=smem, size = 0x4, offset = 0x4, fixed_abs, tag = 'smem constant byte address 0x4 - core index']
  #allocation1 [shape = 'u32[144,128]{1,0:T(1,128)}', space=vmem, size = 0x12000, scoped, tag = 'internal scratch']
  %s0 = inlined_call_operand.vmem [shape: f32[16,64], index: 0, kind: input, shape index: {}]
  %s1 = inlined_call_operand.hbm [shape: bf16[64,128], index: 1, kind: input, shape index: {}]
  %s2 = inlined_call_operand.vmem [shape: f32[16,128], index: 2, kind: output, shape index: {}]
  %s3 = sld [smem:[#allocation0]]
  $region22: #{mlp_out_ort_forward.1} parent=0
    _
  %s5 = ssub.s32 1, %s3
  %s6 = scalar_select 0, %s5, %s3
  $region1: #{mlp_out_ort_forward.1} parent=0
    #allocation2 [shape = 'u8[16384]{0}', space=vmem, size = 0x4000, scoped, tag = 'input window, operand 1, single buffered']
    #allocation3 [shape = 's32[1]{0}', space=sflag, size = 0x4, scoped, tag = 'scoped memory for mlp_out_ort_forward.1']
    %7 = vsyncpa [#allocation3], 0
    // Predicated region
    $region2: #{mlp_out_ort_forward.1} parent=1 // pred_check
      _
    $region3: #{mlp_out_ort_forward.1} parent=1 // pred_check_branch
      %9 = sbr.rel (0) target = $region5
    $region4: #{mlp_out_ort_forward.1} parent=1 // pred_region
      _
    $region5: #{mlp_out_ort_forward.1} parent=1 // pred_fallthru
      _
    // Predicated region
    $region6: #{mlp_out_ort_forward.1} parent=1 // pred_check
      _
    $region7: #{mlp_out_ort_forward.1} parent=1 // pred_check_branch
      %11 = sbr.rel (0) target = $region9
    $region8: #{mlp_out_ort_forward.1} parent=1 // pred_region
      %s13 = ssub.s32 512, 512
      %14 = vsyncadd [#allocation3], %s13
      %s15 = sshll.u32 [#allocation2], 4
      %s16 = int_to_ptr.vmem [resolvable:$true] %s15
      %21 = dma.hbm_to_vmem [thread:$0]  %s1, 512, %s16, [#allocation3], 64, 64, 4
    $region9: #{mlp_out_ort_forward.1} parent=1 // pred_fallthru
      _
    // Predicated region
    $region10: #{mlp_out_ort_forward.1} parent=1 // pred_check
      _
    $region11: #{mlp_out_ort_forward.1} parent=1 // pred_check_branch
      %23 = sbr.rel (0) target = $region13
    $region12: #{mlp_out_ort_forward.1} parent=1 // pred_region
      %24 = dma.done [#allocation3], 512
    $region13: #{mlp_out_ort_forward.1} parent=1 // pred_fallthru
      _
    %v26 = vld [vmem:[%s0] sm:$0xff]
    %v27 = vld [vmem:[%s0 + $0x8] sm:$0xff]
    %v28 = vpack.c.bf16 %v27, %v26
    %v29 = vld [vmem:[#allocation2] sm:$0xf]
    %v30 = vld [vmem:[#allocation2 + $0x4] sm:$0xf]
    %v31 = vld [vmem:[#allocation2 + $0x8] sm:$0xf]
    %v32 = vld [vmem:[#allocation2 + $0xc] sm:$0xf]
    %v33 = vld [vmem:[#allocation2 + $0x10] sm:$0xf]
    %v34 = vld [vmem:[#allocation2 + $0x14] sm:$0xf]
    %v35 = vld [vmem:[#allocation2 + $0x18] sm:$0xf]
    %v36 = vld [vmem:[#allocation2 + $0x1c] sm:$0xf]
    %v45 = vunpack.c.l.b16 %v29
    %v46 = vunpack.c.l.b16 %v30
    %v47 = vunpack.c.l.b16 %v31
    %v48 = vunpack.c.l.b16 %v32
    %v49 = vunpack.c.l.b16 %v33
    %v50 = vunpack.c.l.b16 %v34
    %v51 = vunpack.c.l.b16 %v35
    %v52 = vunpack.c.l.b16 %v36
    %v53 = vpack.c.b16 %v46, %v45
    %v54 = vpack.c.b16 %v48, %v47
    %v55 = vpack.c.b16 %v50, %v49
    %v56 = vpack.c.b16 %v52, %v51
    %vm61 = vcmask 523264
    %v63 = vsel %vm61, %v28, 0
    %65 = vmatprep.subr.bf16.mxu0 0
    %66 = vmatpush1.bf16.msra.mxu0 0
    %67 = vmatprep.subr.bf16.mxu0 0
    %68 = vmatpush1.bf16.msra.mxu0 0
    %69 = vmatprep.subr.bf16.mxu0 0
    %70 = vmatpush1.bf16.msra.mxu0 0
    %71 = vmatprep.subr.bf16.mxu0 0
    %72 = vmatpush1.bf16.msra.mxu0 0
    %73 = vmatprep.subr.bf16.mxu0 0
    %74 = vmatpush1.bf16.msra.mxu0 %v56
    %75 = vmatprep.subr.bf16.mxu0 0
    %76 = vmatpush1.bf16.msra.mxu0 %v55
    %77 = vmatprep.subr.bf16.mxu0 0
    %78 = vmatpush1.bf16.msra.mxu0 %v54
    %79 = vmatprep.subr.bf16.mxu0 0
    %80 = vmatpush1.bf16.msra.mxu0 %v53
    %81 = vmatprep.subr.bf16.mxu0 0
    %82 = vmatpush2.bf16.msra.mxu0 0
    %83 = vmatprep.subr.bf16.mxu0 0
    %84 = vmatpush2.bf16.msra.mxu0 0
    %85 = vmatprep.subr.bf16.mxu0 0
    %86 = vmatpush2.bf16.msra.mxu0 0
    %87 = vmatprep.subr.bf16.mxu0 0
    %88 = vmatpush2.bf16.msra.mxu0 0
    %89 = vmatprep.subr.bf16.mxu0 0
    %90 = vmatpush2.bf16.msra.mxu0 0
    %91 = vmatprep.subr.bf16.mxu0 0
    %92 = vmatpush2.bf16.msra.mxu0 0
    %93 = vmatprep.subr.bf16.mxu0 0
    %94 = vmatpush2.bf16.msra.mxu0 0
    %95 = vmatprep.subr.bf16.mxu0 0
    %96 = vmatpush2.bf16.msra.mxu0 0
    %97 = vmatprep.mubr.bf16.mxu0 0
    %98 = vmatmul.mubr.bf16.gmra.mxu0 %v63
    %v99 = vpop.f32.mrf.mxu0
    %v100 = vadd.f32 0.0, %v99
    %v101 = vpop.f32.mrf.mxu0
    %v102 = vpop.f32.mrf.mxu0
    %v103 = vadd.f32 0.0, %v102
    %v104 = vpop.f32.mrf.mxu0
    %105 = vdwg.mxu0
    %106 = vst [vmem:[%s2] sm:$0xff] %v100
    %107 = vst [vmem:[%s2 + $0x8] sm:$0xff] %v103
    // Predicated region
    $region14: #{mlp_out_ort_forward.1} parent=1 // pred_check
      _
    $region15: #{mlp_out_ort_forward.1} parent=1 // pred_check_branch
      %109 = sbr.rel (0) target = $region17
    $region16: #{mlp_out_ort_forward.1} parent=1 // pred_region
      _
    $region17: #{mlp_out_ort_forward.1} parent=1 // pred_fallthru
      _
    // Predicated region
    $region18: #{mlp_out_ort_forward.1} parent=1 // pred_check
      _
    $region19: #{mlp_out_ort_forward.1} parent=1 // pred_check_branch
      %111 = sbr.rel (0) target = $region21
    $region20: #{mlp_out_ort_forward.1} parent=1 // pred_region
      _
    $region21: #{mlp_out_ort_forward.1} parent=1 // pred_fallthru
      _
    %112 = vsyncpa [#allocation3], 1

</llo_original>
